<compile_context>
chip_gen: v7x
topology: tpu7x:2x2x1
jax: 0.10.0
libtpu: 0.0.40
codegen_flags: <defaults>
</compile_context>

<pallas_src>
import math

import jax
import jax.numpy as jnp
from jax.experimental import pallas as pl
from jax.experimental.pallas import tpu as pltpu


def _round_up(x, m):
    return ((x + m - 1) // m) * m


def _tpu_params():
    """(per-core VMEM bytes, has two TensorCores per chip)."""
    vmem_cap = 64 * 1024 * 1024  # conservative default (v7x per-TC VMEM)
    try:
        vmem_cap = int(pltpu.get_tpu_info().vmem_capacity_bytes)
    except Exception:
        pass
    two_cores = False
    try:
        kind = jax.devices()[0].device_kind.lower()
        two_cores = ("v7" in kind) or ("7x" in kind)
    except Exception:
        pass
    return vmem_cap, two_cores


# ----------------------------------------------------------------------------
# Kernels
# ----------------------------------------------------------------------------
def _random_hq_kernel(x_ref, wt_ref, o_ref):
    """out = hard_quantize(sign(x @ W.T)) == where(x @ W.T > 0, 1, -1)."""
    y = jnp.dot(x_ref[...], wt_ref[...], preferred_element_type=jnp.float32)
    o_ref[...] = jnp.where(y > 0.0, 1.0, -1.0).astype(o_ref.dtype)


def _sinusoid_hq_kernel(x_ref, wt_ref, b_ref, o_ref):
    """out = hard_quantize(sign(cos(xW.T + b) * sin(xW.T)))."""
    y = jnp.dot(x_ref[...], wt_ref[...], preferred_element_type=jnp.float32)
    p = jnp.cos(y + b_ref[...]) * jnp.sin(y)   # sign() folded into compare
    o_ref[...] = jnp.where(p > 0.0, 1.0, -1.0).astype(o_ref.dtype)


# Tiled-K fallback kernels (very large flattened inputs): f32 accumulator.
def _random_hq_acc_kernel(x_ref, wt_ref, o_ref, acc_ref):
    k = pl.program_id(2)

    @pl.when(k == 0)
    def _():
        acc_ref[...] = jnp.zeros_like(acc_ref)

    acc_ref[...] += jnp.dot(x_ref[...], wt_ref[...],
                            preferred_element_type=jnp.float32)

    @pl.when(k == pl.num_programs(2) - 1)
    def _():
        o_ref[...] = jnp.where(acc_ref[...] > 0.0, 1.0, -1.0).astype(o_ref.dtype)


def _sinusoid_hq_acc_kernel(x_ref, wt_ref, b_ref, o_ref, acc_ref):
    k = pl.program_id(2)

    @pl.when(k == 0)
    def _():
        acc_ref[...] = jnp.zeros_like(acc_ref)

    acc_ref[...] += jnp.dot(x_ref[...], wt_ref[...],
                            preferred_element_type=jnp.float32)

    @pl.when(k == pl.num_programs(2) - 1)
    def _():
        y = acc_ref[...]
        p = jnp.cos(y + b_ref[...]) * jnp.sin(y)
        o_ref[...] = jnp.where(p > 0.0, 1.0, -1.0).astype(o_ref.dtype)


# ----------------------------------------------------------------------------
# Tile selection
# ----------------------------------------------------------------------------
def _pick_tiles_resident(B, D, K, x_isz, w_isz, budget, two_cores):
    """Tiles for the K-resident path, or None if K can't stay resident."""
    B_pad0 = _round_up(B, 8)
    tm = min(B_pad0, 256)
    # Shrink tm first if the resident (tm, K) x slab eats too much of the budget.
    while tm > 8 and 2 * x_isz * tm * K > budget // 4:
        tm = max(8, _round_up(tm // 2, 8))
    x_fp = 2 * x_isz * tm * K

    # Minimal footprint (tn = 128): if this doesn't fit, tile K instead.
    min_fp = x_fp + 2 * w_isz * K * 128 + 2 * 4 * tm * 128 + 2 * 4 * 128
    if min_fp > budget:
        return None

    # D tile: as large as the remaining budget allows (double-buffered).
    per_col = 2 * w_isz * K + 2 * 4 * tm + 2 * 4
    max_tn = max(128, ((budget - x_fp) // per_col) // 128 * 128)
    n_j = pl.cdiv(D, max_tn)
    if two_cores and D > 256:
        # Megacore split lands on D (disjoint weight columns per core), balanced.
        n_j = max(n_j, 2)
        n_j = n_j + (n_j % 2)
    tn = _round_up(pl.cdiv(D, n_j), 128)
    D_pad = tn * n_j
    B_pad = _round_up(B_pad0, tm)
    return B_pad, tm, D_pad, tn


def _pick_tiles_tiled_k(B, D, K, x_isz, w_isz, budget, two_cores):
    B_pad0 = _round_up(B, 8)
    tm = min(B_pad0, 128)
    tn = min(_round_up(D, 128), 512)
    if two_cores and D > 256:
        tn = min(tn, _round_up(pl.cdiv(D, 2), 128))
    fixed = 2 * 4 * tm * tn + 4 * tm * tn + 2 * 4 * tn  # out (dbl) + acc + bias
    per_k = 2 * x_isz * tm + 2 * w_isz * tn
    tk = max(128, max(0, (budget - fixed)) // per_k // 128 * 128)
    tk = min(tk, _round_up(K, 128))
    K_pad = _round_up(K, tk)
    D_pad = _round_up(D, tn)
    B_pad = _round_up(B_pad0, tm)
    return B_pad, tm, D_pad, tn, K_pad, tk


# ----------------------------------------------------------------------------
# pallas_call wrapper
# ----------------------------------------------------------------------------
def _projection_encode(x2d, w_t, bias=None):
    """x2d: (B, K), w_t: (K, D), bias: (1, D) f32 or None -> (B, D) f32."""
    B, K = x2d.shape
    _, D = w_t.shape
    x_isz = jnp.dtype(x2d.dtype).itemsize
    w_isz = jnp.dtype(w_t.dtype).itemsize

    vmem_cap, two_cores = _tpu_params()
    budget = int(vmem_cap * 0.6)

    tiles = _pick_tiles_resident(B, D, K, x_isz, w_isz, budget, two_cores)

    if tiles is not None:
        # --- K-resident path: one dot + fused epilogue per grid step -------
        B_pad, tm, D_pad, tn = tiles
        if B_pad != B:
            x2d = jnp.pad(x2d, ((0, B_pad - B), (0, 0)))
        if D_pad != D:
            w_t = jnp.pad(w_t, ((0, 0), (0, D_pad - D)))
            if bias is not None:
                bias = jnp.pad(bias, ((0, 0), (0, D_pad - D)))

        # Batch innermost: the (K, tn) weight block stays resident across
        # consecutive batch tiles; only the small x tile re-streams.
        grid = (D_pad // tn, B_pad // tm)
        x_spec = pl.BlockSpec((tm, K), lambda j, i: (i, 0))
        w_spec = pl.BlockSpec((K, tn), lambda j, i: (0, j))
        o_spec = pl.BlockSpec((tm, tn), lambda j, i: (i, j))

        if bias is None:
            kernel = _random_hq_kernel
            in_specs = [x_spec, w_spec]
            args = (x2d, w_t)
        else:
            kernel = _sinusoid_hq_kernel
            b_spec = pl.BlockSpec((1, tn), lambda j, i: (0, j))
            in_specs = [x_spec, w_spec, b_spec]
            args = (x2d, w_t, bias)

        scratch = []
        dims = ("parallel", "parallel")
        vmem_need = (2 * x_isz * tm * K + 2 * w_isz * K * tn
                     + 2 * 4 * tm * tn + 2 * 4 * tn)
    else:
        # --- Tiled-K fallback (very large flattened inputs) -----------------
        B_pad, tm, D_pad, tn, K_pad, tk = _pick_tiles_tiled_k(
            B, D, K, x_isz, w_isz, budget, two_cores)
        x2d = jnp.pad(x2d, ((0, B_pad - B), (0, K_pad - K)))
        w_t = jnp.pad(w_t, ((0, K_pad - K), (0, D_pad - D)))
        if bias is not None:
            bias = jnp.pad(bias, ((0, 0), (0, D_pad - D)))

        grid = (D_pad // tn, B_pad // tm, K_pad // tk)
        x_spec = pl.BlockSpec((tm, tk), lambda j, i, k: (i, k))
        w_spec = pl.BlockSpec((tk, tn), lambda j, i, k: (k, j))
        o_spec = pl.BlockSpec((tm, tn), lambda j, i, k: (i, j))

        if bias is None:
            kernel = _random_hq_acc_kernel
            in_specs = [x_spec, w_spec]
            args = (x2d, w_t)
        else:
            kernel = _sinusoid_hq_acc_kernel
            b_spec = pl.BlockSpec((1, tn), lambda j, i, k: (0, j))
            in_specs = [x_spec, w_spec, b_spec]
            args = (x2d, w_t, bias)

        scratch = [pltpu.VMEM((tm, tn), jnp.float32)]
        dims = ("parallel", "arbitrary", "arbitrary")
        vmem_need = (2 * x_isz * tm * tk + 2 * w_isz * tk * tn
                     + 2 * 4 * tm * tn + 4 * tm * tn + 2 * 4 * tn)

    # Footprint + modest headroom, capped below the physical per-core VMEM.
    vmem_limit = int(max(16 << 20, min(vmem_need + (6 << 20),
                                       vmem_cap - (4 << 20))))
    vmem_limit = min(max(vmem_limit, vmem_need), vmem_cap)

    out = pl.pallas_call(
        kernel,
        out_shape=jax.ShapeDtypeStruct((B_pad, D_pad), jnp.float32),
        grid_spec=pltpu.PrefetchScalarGridSpec(
            num_scalar_prefetch=0,
            grid=grid,
            in_specs=in_specs,
            out_specs=o_spec,
            scratch_shapes=scratch,
        ),
        compiler_params=pltpu.CompilerParams(
            dimension_semantics=dims,
            vmem_limit_bytes=vmem_limit,
        ),
    )(*args)

    return out[:B, :D]


# ----------------------------------------------------------------------------
# Encoder (JAX-side parameter setup + dispatch)
# ----------------------------------------------------------------------------
class Encoder:
    def __init__(self, size, dimensions, encoding, name, *, key,
                 weight_dtype=jnp.float32):
        self.encoding = encoding
        self.size = size
        self.dimensions = dimensions
        self.weight_dtype = jnp.dtype(weight_dtype)
        kw, kb = jax.random.split(key)

        if encoding == "random":
            # torchhd embeddings.Projection: normal(0,1), L2-normalize rows.
            w = jax.random.normal(kw, (dimensions, size), jnp.float32)
            w = w / jnp.linalg.norm(w, axis=-1, keepdims=True)
            self.weight_t = jnp.asarray(w.T, dtype=weight_dtype)  # (size, D)
            self.bias = None
        elif encoding == "sinusoid":
            # torchhd embeddings.Sinusoid: normal(0,1) weight, uniform(0,2pi) bias.
            w = jax.random.normal(kw, (dimensions, size), jnp.float32)
            self.weight_t = jnp.asarray(w.T, dtype=weight_dtype)
            self.bias = jax.random.uniform(
                kb, (1, dimensions), jnp.float32, 0.0, 2.0 * math.pi)
        else:
            raise NotImplementedError(
                f"encoding '{encoding}' not implemented in this Pallas port")

    def __call__(self, x):
        # flatten() + .float()  (glue, plain JAX); cast once to weight dtype so
        # the kernel does no per-step re-cast of the resident x block.
        B = x.shape[0]
        x2d = jnp.reshape(x, (B, -1)).astype(self.weight_dtype)
        return _projection_encode(x2d, self.weight_t, self.bias)


# ----------------------------------------------------------------------------
# Main
# ----------------------------------------------------------------------------
if __name__ == "__main__":
    key = jax.random.PRNGKey(0)
    kx, k1, k2 = jax.random.split(key, 3)

    # small shapes: batch=2, channels=4, spatial=16 -> size = 4*16*16 = 1024
    B, C, H, W = 2, 4, 16, 16
    size = C * H * W
    dimensions = 512
    x = jax.random.normal(kx, (B, C, H, W), jnp.float32)

    # 'random' branch
    enc_random = Encoder(size, dimensions, "random", "synthetic", key=k1)
    out_random = jax.block_until_ready(enc_random(x))

    # 'sinusoid' branch
    enc_sin = Encoder(size, dimensions, "sinusoid", "synthetic", key=k2)
    out_sin = jax.block_until_ready(enc_sin(x))

    assert out_random.shape == (B, dimensions)
    assert out_sin.shape == (B, dimensions)
    assert bool(jnp.all(jnp.abs(out_random) == 1.0))
    assert bool(jnp.all(jnp.abs(out_sin) == 1.0))

    # Reference check (plain JAX, highest-precision matmul). Sign flips are
    # only tolerated where the pre-sign value is within matmul rounding of 0.
    x2d = x.reshape(B, -1).astype(jnp.float32)
    y_r = jnp.dot(x2d, enc_random.weight_t.astype(jnp.float32),
                  precision=jax.lax.Precision.HIGHEST)
    ref_random = jnp.where(y_r > 0.0, 1.0, -1.0)
    ok_r = jnp.where(out_random != ref_random, jnp.abs(y_r) < 1e-2, True)
    assert bool(jnp.all(ok_r))

    y_s = jnp.dot(x2d, enc_sin.weight_t.astype(jnp.float32),
                  precision=jax.lax.Precision.HIGHEST)
    p_s = jnp.cos(y_s + enc_sin.bias) * jnp.sin(y_s)
    ref_sin = jnp.where(p_s > 0.0, 1.0, -1.0)
    ok_s = jnp.where(out_sin != ref_sin, jnp.abs(p_s) < 1e-2, True)
    assert bool(jnp.all(ok_s))

    print("KERNEL_OK")
</pallas_src>

<mosaic_0001>
module attributes {stable_mosaic.version = 11 : i64} {
  func.func @_random_hq_kernel(%arg0: i32, %arg1: i32, %arg2: memref<8x1024xf32, #tpu.memory_space<vmem>>, %arg3: memref<1024x512xf32, #tpu.memory_space<vmem>>, %arg4: memref<8x512xf32, #tpu.memory_space<vmem>>) attributes {dimension_semantics = [#tpu.dimension_semantics<parallel>, #tpu.dimension_semantics<parallel>], iteration_bounds = array<i64: 1, 1>, scalar_prefetch = 0 : i64, scratch_operands = 0 : i64, tpu.core_type = #tpu.core_type<tc>, window_params = [{transform_indices = @transform_0, window_bounds = array<i64: 8, 1024>}, {transform_indices = @transform_1, window_bounds = array<i64: 1024, 512>}, {transform_indices = @transform_2, window_bounds = array<i64: 8, 512>}]} {
    %c0 = arith.constant 0 : index
    %c0_0 = arith.constant 0 : index
    %0 = vector.load %arg2[%c0, %c0_0] : memref<8x1024xf32, #tpu.memory_space<vmem>>, vector<8x1024xf32>
    %c0_1 = arith.constant 0 : index
    %c0_2 = arith.constant 0 : index
    %1 = vector.load %arg3[%c0_1, %c0_2] : memref<1024x512xf32, #tpu.memory_space<vmem>>, vector<1024x512xf32>
    %cst = arith.constant dense<0.000000e+00> : vector<8x512xf32>
    %2 = tpu.matmul %0, %1, %cst {dimension_numbers = #tpu.dot_dimension_numbers<[1], [0], [0], [1], [0, 0, 1, 1], [], []>} : vector<8x1024xf32>, vector<1024x512xf32>, vector<8x512xf32> -> vector<8x512xf32>
    %cst_3 = arith.constant 0.000000e+00 : f32
    %3 = vector.broadcast %cst_3 : f32 to vector<8x512xf32>
    %4 = arith.cmpf ogt, %2, %3 : vector<8x512xf32>
    %cst_4 = arith.constant 1.000000e+00 : f32
    %cst_5 = arith.constant -1.000000e+00 : f32
    %5 = vector.broadcast %cst_4 : f32 to vector<8x512xf32>
    %6 = vector.broadcast %cst_5 : f32 to vector<8x512xf32>
    %7 = arith.select %4, %5, %6 : vector<8x512xi1>, vector<8x512xf32>
    %c0_6 = arith.constant 0 : index
    %c0_7 = arith.constant 0 : index
    %8 = vector.load %arg4[%c0_6, %c0_7] : memref<8x512xf32, #tpu.memory_space<vmem>>, vector<8x512xf32>
    tpu.vector_store %arg4[%c0_6, %c0_7], %7 {strides = array<i32>} : memref<8x512xf32, #tpu.memory_space<vmem>>, vector<8x512xf32>,
    return
  }
  func.func @transform_0(%arg0: i32, %arg1: i32) -> (i32, i32) {
    %c0_i32 = arith.constant 0 : i32
    %c0_i32_0 = arith.constant 0 : i32
    return %arg1, %c0_i32 : i32, i32
  }
  func.func @transform_1(%arg0: i32, %arg1: i32) -> (i32, i32) {
    %c0_i32 = arith.constant 0 : i32
    %c0_i32_0 = arith.constant 0 : i32
    return %c0_i32, %arg0 : i32, i32
  }
  func.func @transform_2(%arg0: i32, %arg1: i32) -> (i32, i32) {
    %c0_i32 = arith.constant 0 : i32
    return %arg1, %arg0 : i32, i32
  }
}

</mosaic_0001>

<llo_original>
// kernel: tpu_custom_call.1
$region0: #{tpu_custom_call.1}
  #allocation0 [shape = 'u32[]', space=smem, size = 0x4, offset = 0x4, fixed_abs, tag = 'smem constant byte address 0x4 - core index']
  #allocation1 [shape = 'u32[144,128]{1,0:T(1,128)}', space=vmem, size = 0x12000, scoped, tag = 'internal scratch']
  %s0 = inlined_call_operand.hbm [shape: f32[8,1024], index: 0, kind: input, shape index: {}]
  %s1 = inlined_call_operand.hbm [shape: f32[1024,512], index: 1, kind: input, shape index: {}]
  %s2 = inlined_call_operand.hbm [shape: f32[8,512], index: 2, kind: output, shape index: {}]
  %s3 = sld [smem:[#allocation0]]
  $region26: #{tpu_custom_call.1} parent=0
    _
  %s5 = ssub.s32 1, %s3
  %s6 = scalar_select 0, %s5, %s3
  $region1: #{tpu_custom_call.1} parent=0
    #allocation2 [shape = 'u8[32768]{0}', space=vmem, size = 0x8000, scoped, tag = 'input window, operand 0, single buffered']
    #allocation3 [shape = 's32[1]{0}', space=sflag, size = 0x4, scoped, tag = 'scoped memory for tpu_custom_call.1']
    #allocation4 [shape = 's32[1]{0}', space=sflag, size = 0x4, scoped, tag = 'scoped memory for tpu_custom_call.1']
    #allocation5 [shape = 'u8[2097152]{0}', space=vmem, size = 0x200000, scoped, tag = 'input window, operand 1, single buffered']
    #allocation6 [shape = 's32[1]{0}', space=sflag, size = 0x4, scoped, tag = 'scoped memory for tpu_custom_call.1']
    #allocation7 [shape = 'u8[16384]{0}', space=vmem, size = 0x4000, scoped, tag = 'output window, operand 0, single buffered']
    %7 = vsyncpa [#allocation3], 0
    %8 = vsyncpa [#allocation6], 0
    %9 = vsyncpa [#allocation4], 0
    // Predicated region
    $region2: #{tpu_custom_call.1} parent=1 // pred_check
      _
    $region3: #{tpu_custom_call.1} parent=1 // pred_check_branch
      %11 = sbr.rel (0) target = $region5
    $region4: #{tpu_custom_call.1} parent=1 // pred_region
      %s13 = ssub.s32 1024, 1024
      %14 = vsyncadd [#allocation3], %s13
      %s16 = sshll.u32 [#allocation2], 4
      %s17 = int_to_ptr.vmem [resolvable:$true] %s16
      %19 = dma.hbm_to_vmem [thread:$0]  %s0, 1024, %s17, [#allocation3]
    $region5: #{tpu_custom_call.1} parent=1 // pred_fallthru
      _
    // Predicated region
    $region6: #{tpu_custom_call.1} parent=1 // pred_check
      _
    $region7: #{tpu_custom_call.1} parent=1 // pred_check_branch
      %21 = sbr.rel (0) target = $region9
    $region8: #{tpu_custom_call.1} parent=1 // pred_region
      %s23 = ssub.s32 65536, 65536
      %24 = vsyncadd [#allocation6], %s23
      %s25 = sshll.u32 [#allocation5], 4
      %s26 = int_to_ptr.vmem [resolvable:$true] %s25
      %31 = dma.hbm_to_vmem [thread:$0]  %s1, 65536, %s26, [#allocation6], 512, 512, 32
    $region9: #{tpu_custom_call.1} parent=1 // pred_fallthru
      _
    // Predicated region
    $region10: #{tpu_custom_call.1} parent=1 // pred_check
      _
    $region11: #{tpu_custom_call.1} parent=1 // pred_check_branch
      %33 = sbr.rel (0) target = $region13
    $region12: #{tpu_custom_call.1} parent=1 // pred_region
      %34 = dma.done [#allocation3], 1024
    $region13: #{tpu_custom_call.1} parent=1 // pred_fallthru
      _
    // Predicated region
    $region14: #{tpu_custom_call.1} parent=1 // pred_check
      _
    $region15: #{tpu_custom_call.1} parent=1 // pred_check_branch
      %36 = sbr.rel (0) target = $region17
    $region16: #{tpu_custom_call.1} parent=1 // pred_region
      %37 = dma.done [#allocation6], 65536
    $region17: #{tpu_custom_call.1} parent=1 // pred_fallthru
      _
    %v38 = vld [vmem:[#allocation2] sm:$0xff]
    %v39 = vld [vmem:[#allocation2 + $0x8] sm:$0xff]
    %v40 = vld [vmem:[#allocation2 + $0x10] sm:$0xff]
    %v41 = vld [vmem:[#allocation2 + $0x18] sm:$0xff]
    %v42 = vld [vmem:[#allocation2 + $0x20] sm:$0xff]
    %v43 = vld [vmem:[#allocation2 + $0x28] sm:$0xff]
    %v44 = vld [vmem:[#allocation2 + $0x30] sm:$0xff]
    %v45 = vld [vmem:[#allocation2 + $0x38] sm:$0xff]
    %v46 = vld [vmem:[#allocation5] sm:$0xff]
    %v47 = vld [vmem:[#allocation5 + $0x8] sm:$0xff]
    %v48 = vld [vmem:[#allocation5 + $0x10] sm:$0xff]
    %v49 = vld [vmem:[#allocation5 + $0x18] sm:$0xff]
    %v50 = vld [vmem:[#allocation5 + $0x20] sm:$0xff]
    %v51 = vld [vmem:[#allocation5 + $0x28] sm:$0xff]
    %v52 = vld [vmem:[#allocation5 + $0x30] sm:$0xff]
    %v53 = vld [vmem:[#allocation5 + $0x38] sm:$0xff]
    %v54 = vld [vmem:[#allocation5 + $0x40] sm:$0xff]
    %v55 = vld [vmem:[#allocation5 + $0x48] sm:$0xff]
    %v56 = vld [vmem:[#allocation5 + $0x50] sm:$0xff]
    %v57 = vld [vmem:[#allocation5 + $0x58] sm:$0xff]
    %v58 = vld [vmem:[#allocation5 + $0x60] sm:$0xff]
    %v59 = vld [vmem:[#allocation5 + $0x68] sm:$0xff]
    %v60 = vld [vmem:[#allocation5 + $0x70] sm:$0xff]
    %v61 = vld [vmem:[#allocation5 + $0x78] sm:$0xff]
    %v62 = vld [vmem:[#allocation5 + $0x80] sm:$0xff]
    %v63 = vld [vmem:[#allocation5 + $0x88] sm:$0xff]
    %v64 = vld [vmem:[#allocation5 + $0x90] sm:$0xff]
    %v65 = vld [vmem:[#allocation5 + $0x98] sm:$0xff]
    %v66 = vld [vmem:[#allocation5 + $0xa0] sm:$0xff]
    %v67 = vld [vmem:[#allocation5 + $0xa8] sm:$0xff]
    %v68 = vld [vmem:[#allocation5 + $0xb0] sm:$0xff]
    %v69 = vld [vmem:[#allocation5 + $0xb8] sm:$0xff]
    %v70 = vld [vmem:[#allocation5 + $0xc0] sm:$0xff]
    %v71 = vld [vmem:[#allocation5 + $0xc8] sm:$0xff]
    %v72 = vld [vmem:[#allocation5 + $0xd0] sm:$0xff]
    %v73 = vld [vmem:[#allocation5 + $0xd8] sm:$0xff]
    %v74 = vld [vmem:[#allocation5 + $0xe0] sm:$0xff]
    %v75 = vld [vmem:[#allocation5 + $0xe8] sm:$0xff]
    %v76 = vld [vmem:[#allocation5 + $0xf0] sm:$0xff]
    %v77 = vld [vmem:[#allocation5 + $0xf8] sm:$0xff]
    %v78 = vld [vmem:[#allocation5 + $0x100] sm:$0xff]
    %v79 = vld [vmem:[#allocation5 + $0x108] sm:$0xff]
    %v80 = vld [vmem:[#allocation5 + $0x110] sm:$0xff]
    %v81 = vld [vmem:[#allocation5 + $0x118] sm:$0xff]
    %v82 = vld [vmem:[#allocation5 + $0x120] sm:$0xff]
    %v83 = vld [vmem:[#allocation5 + $0x128] sm:$0xff]
    %v84 = vld [vmem:[#allocation5 + $0x130] sm:$0xff]
    %v85 = vld [vmem:[#allocation5 + $0x138] sm:$0xff]
    %v86 = vld [vmem:[#allocation5 + $0x140] sm:$0xff]
    %v87 = vld [vmem:[#allocation5 + $0x148] sm:$0xff]
    %v88 = vld [vmem:[#allocation5 + $0x150] sm:$0xff]
    %v89 = vld [vmem:[#allocation5 + $0x158] sm:$0xff]
    %v90 = vld [vmem:[#allocation5 + $0x160] sm:$0xff]
    %v91 = vld [vmem:[#allocation5 + $0x168] sm:$0xff]
    %v92 = vld [vmem:[#allocation5 + $0x170] sm:$0xff]
    %v93 = vld [vmem:[#allocation5 + $0x178] sm:$0xff]
    %v94 = vld [vmem:[#allocation5 + $0x180] sm:$0xff]
    %v95 = vld [vmem:[#allocation5 + $0x188] sm:$0xff]
    %v96 = vld [vmem:[#allocation5 + $0x190] sm:$0xff]
    %v97 = vld [vmem:[#allocation5 + $0x198] sm:$0xff]
    %v98 = vld [vmem:[#allocation5 + $0x1a0] sm:$0xff]
    %v99 = vld [vmem:[#allocation5 + $0x1a8] sm:$0xff]
    %v100 = vld [vmem:[#allocation5 + $0x1b0] sm:$0xff]
    %v101 = vld [vmem:[#allocation5 + $0x1b8] sm:$0xff]
    %v102 = vld [vmem:[#allocation5 + $0x1c0] sm:$0xff]
    %v103 = vld [vmem:[#allocation5 + $0x1c8] sm:$0xff]
    %v104 = vld [vmem:[#allocation5 + $0x1d0] sm:$0xff]
    %v105 = vld [vmem:[#allocation5 + $0x1d8] sm:$0xff]
    %v106 = vld [vmem:[#allocation5 + $0x1e0] sm:$0xff]
    %v107 = vld [vmem:[#allocation5 + $0x1e8] sm:$0xff]
    %v108 = vld [vmem:[#allocation5 + $0x1f0] sm:$0xff]
    %v109 = vld [vmem:[#allocation5 + $0x1f8] sm:$0xff]
    %v110 = vld [vmem:[#allocation5 + $0x200] sm:$0xff]
    %v111 = vld [vmem:[#allocation5 + $0x208] sm:$0xff]
    %v112 = vld [vmem:[#allocation5 + $0x210] sm:$0xff]
    %v113 = vld [vmem:[#allocation5 + $0x218] sm:$0xff]
    %v114 = vld [vmem:[#allocation5 + $0x220] sm:$0xff]
    %v115 = vld [vmem:[#allocation5 + $0x228] sm:$0xff]
    %v116 = vld [vmem:[#allocation5 + $0x230] sm:$0xff]
    %v117 = vld [vmem:[#allocation5 + $0x238] sm:$0xff]
    %v118 = vld [vmem:[#allocation5 + $0x240] sm:$0xff]
    %v119 = vld [vmem:[#allocation5 + $0x248] sm:$0xff]
    %v120 = vld [vmem:[#allocation5 + $0x250] sm:$0xff]
    %v121 = vld [vmem:[#allocation5 + $0x258] sm:$0xff]
    %v122 = vld [vmem:[#allocation5 + $0x260] sm:$0xff]
    %v123 = vld [vmem:[#allocation5 + $0x268] sm:$0xff]
    %v124 = vld [vmem:[#allocation5 + $0x270] sm:$0xff]
    %v125 = vld [vmem:[#allocation5 + $0x278] sm:$0xff]
    %v126 = vld [vmem:[#allocation5 + $0x280] sm:$0xff]
    %v127 = vld [vmem:[#allocation5 + $0x288] sm:$0xff]
    %v128 = vld [vmem:[#allocation5 + $0x290] sm:$0xff]
    %v129 = vld [vmem:[#allocation5 + $0x298] sm:$0xff]
    %v130 = vld [vmem:[#allocation5 + $0x2a0] sm:$0xff]
    %v131 = vld [vmem:[#allocation5 + $0x2a8] sm:$0xff]
    %v132 = vld [vmem:[#allocation5 + $0x2b0] sm:$0xff]
    %v133 = vld [vmem:[#allocation5 + $0x2b8] sm:$0xff]
    %v134 = vld [vmem:[#allocation5 + $0x2c0] sm:$0xff]
    %v135 = vld [vmem:[#allocation5 + $0x2c8] sm:$0xff]
    %v136 = vld [vmem:[#allocation5 + $0x2d0] sm:$0xff]
    %v137 = vld [vmem:[#allocation5 + $0x2d8] sm:$0xff]
    %v138 = vld [vmem:[#allocation5 + $0x2e0] sm:$0xff]
    %v139 = vld [vmem:[#allocation5 + $0x2e8] sm:$0xff]
    %v140 = vld [vmem:[#allocation5 + $0x2f0] sm:$0xff]
    %v141 = vld [vmem:[#allocation5 + $0x2f8] sm:$0xff]
    %v142 = vld [vmem:[#allocation5 + $0x300] sm:$0xff]
    %v143 = vld [vmem:[#allocation5 + $0x308] sm:$0xff]
    %v144 = vld [vmem:[#allocation5 + $0x310] sm:$0xff]
    %v145 = vld [vmem:[#allocation5 + $0x318] sm:$0xff]
    %v146 = vld [vmem:[#allocation5 + $0x320] sm:$0xff]
    %v147 = vld [vmem:[#allocation5 + $0x328] sm:$0xff]
    %v148 = vld [vmem:[#allocation5 + $0x330] sm:$0xff]
    %v149 = vld [vmem:[#allocation5 + $0x338] sm:$0xff]
    %v150 = vld [vmem:[#allocation5 + $0x340] sm:$0xff]
    %v151 = vld [vmem:[#allocation5 + $0x348] sm:$0xff]
    %v152 = vld [vmem:[#allocation5 + $0x350] sm:$0xff]
    %v153 = vld [vmem:[#allocation5 + $0x358] sm:$0xff]
    %v154 = vld [vmem:[#allocation5 + $0x360] sm:$0xff]
    %v155 = vld [vmem:[#allocation5 + $0x368] sm:$0xff]
    %v156 = vld [vmem:[#allocation5 + $0x370] sm:$0xff]
    %v157 = vld [vmem:[#allocation5 + $0x378] sm:$0xff]
    %v158 = vld [vmem:[#allocation5 + $0x380] sm:$0xff]
    %v159 = vld [vmem:[#allocation5 + $0x388] sm:$0xff]
    %v160 = vld [vmem:[#allocation5 + $0x390] sm:$0xff]
    %v161 = vld [vmem:[#allocation5 + $0x398] sm:$0xff]
    %v162 = vld [vmem:[#allocation5 + $0x3a0] sm:$0xff]
    %v163 = vld [vmem:[#allocation5 + $0x3a8] sm:$0xff]
    %v164 = vld [vmem:[#allocation5 + $0x3b0] sm:$0xff]
    %v165 = vld [vmem:[#allocation5 + $0x3b8] sm:$0xff]
    %v166 = vld [vmem:[#allocation5 + $0x3c0] sm:$0xff]
    %v167 = vld [vmem:[#allocation5 + $0x3c8] sm:$0xff]
    %v168 = vld [vmem:[#allocation5 + $0x3d0] sm:$0xff]
    %v169 = vld [vmem:[#allocation5 + $0x3d8] sm:$0xff]
    %v170 = vld [vmem:[#allocation5 + $0x3e0] sm:$0xff]
    %v171 = vld [vmem:[#allocation5 + $0x3e8] sm:$0xff]
    %v172 = vld [vmem:[#allocation5 + $0x3f0] sm:$0xff]
    %v173 = vld [vmem:[#allocation5 + $0x3f8] sm:$0xff]
    %v174 = vld [vmem:[#allocation5 + $0x400] sm:$0xff]
    %v175 = vld [vmem:[#allocation5 + $0x408] sm:$0xff]
    %v176 = vld [vmem:[#allocation5 + $0x410] sm:$0xff]
    %v177 = vld [vmem:[#allocation5 + $0x418] sm:$0xff]
    %v178 = vld [vmem:[#allocation5 + $0x420] sm:$0xff]
    %v179 = vld [vmem:[#allocation5 + $0x428] sm:$0xff]
    %v180 = vld [vmem:[#allocation5 + $0x430] sm:$0xff]
    %v181 = vld [vmem:[#allocation5 + $0x438] sm:$0xff]
    %v182 = vld [vmem:[#allocation5 + $0x440] sm:$0xff]
    %v183 = vld [vmem:[#allocation5 + $0x448] sm:$0xff]
    %v184 = vld [vmem:[#allocation5 + $0x450] sm:$0xff]
    %v185 = vld [vmem:[#allocation5 + $0x458] sm:$0xff]
    %v186 = vld [vmem:[#allocation5 + $0x460] sm:$0xff]
    %v187 = vld [vmem:[#allocation5 + $0x468] sm:$0xff]
    %v188 = vld [vmem:[#allocation5 + $0x470] sm:$0xff]
    %v189 = vld [vmem:[#allocation5 + $0x478] sm:$0xff]
    %v190 = vld [vmem:[#allocation5 + $0x480] sm:$0xff]
    %v191 = vld [vmem:[#allocation5 + $0x488] sm:$0xff]
    %v192 = vld [vmem:[#allocation5 + $0x490] sm:$0xff]
    %v193 = vld [vmem:[#allocation5 + $0x498] sm:$0xff]
    %v194 = vld [vmem:[#allocation5 + $0x4a0] sm:$0xff]
    %v195 = vld [vmem:[#allocation5 + $0x4a8] sm:$0xff]
    %v196 = vld [vmem:[#allocation5 + $0x4b0] sm:$0xff]
    %v197 = vld [vmem:[#allocation5 + $0x4b8] sm:$0xff]
    %v198 = vld [vmem:[#allocation5 + $0x4c0] sm:$0xff]
    %v199 = vld [vmem:[#allocation5 + $0x4c8] sm:$0xff]
    %v200 = vld [vmem:[#allocation5 + $0x4d0] sm:$0xff]
    %v201 = vld [vmem:[#allocation5 + $0x4d8] sm:$0xff]
    %v202 = vld [vmem:[#allocation5 + $0x4e0] sm:$0xff]
    %v203 = vld [vmem:[#allocation5 + $0x4e8] sm:$0xff]
    %v204 = vld [vmem:[#allocation5 + $0x4f0] sm:$0xff]
    %v205 = vld [vmem:[#allocation5 + $0x4f8] sm:$0xff]
    %v206 = vld [vmem:[#allocation5 + $0x500] sm:$0xff]
    %v207 = vld [vmem:[#allocation5 + $0x508] sm:$0xff]
    %v208 = vld [vmem:[#allocation5 + $0x510] sm:$0xff]
    %v209 = vld [vmem:[#allocation5 + $0x518] sm:$0xff]
    %v210 = vld [vmem:[#allocation5 + $0x520] sm:$0xff]
    %v211 = vld [vmem:[#allocation5 + $0x528] sm:$0xff]
    %v212 = vld [vmem:[#allocation5 + $0x530] sm:$0xff]
    %v213 = vld [vmem:[#allocation5 + $0x538] sm:$0xff]
    %v214 = vld [vmem:[#allocation5 + $0x540] sm:$0xff]
    %v215 = vld [vmem:[#allocation5 + $0x548] sm:$0xff]
    %v216 = vld [vmem:[#allocation5 + $0x550] sm:$0xff]
    %v217 = vld [vmem:[#allocation5 + $0x558] sm:$0xff]
    %v218 = vld [vmem:[#allocation5 + $0x560] sm:$0xff]
    %v219 = vld [vmem:[#allocation5 + $0x568] sm:$0xff]
    %v220 = vld [vmem:[#allocation5 + $0x570] sm:$0xff]
    %v221 = vld [vmem:[#allocation5 + $0x578] sm:$0xff]
    %v222 = vld [vmem:[#allocation5 + $0x580] sm:$0xff]
    %v223 = vld [vmem:[#allocation5 + $0x588] sm:$0xff]
    %v224 = vld [vmem:[#allocation5 + $0x590] sm:$0xff]
    %v225 = vld [vmem:[#allocation5 + $0x598] sm:$0xff]
    %v226 = vld [vmem:[#allocation5 + $0x5a0] sm:$0xff]
    %v227 = vld [vmem:[#allocation5 + $0x5a8] sm:$0xff]
    %v228 = vld [vmem:[#allocation5 + $0x5b0] sm:$0xff]
    %v229 = vld [vmem:[#allocation5 + $0x5b8] sm:$0xff]
    %v230 = vld [vmem:[#allocation5 + $0x5c0] sm:$0xff]
    %v231 = vld [vmem:[#allocation5 + $0x5c8] sm:$0xff]
    %v232 = vld [vmem:[#allocation5 + $0x5d0] sm:$0xff]
    %v233 = vld [vmem:[#allocation5 + $0x5d8] sm:$0xff]
    %v234 = vld [vmem:[#allocation5 + $0x5e0] sm:$0xff]
    %v235 = vld [vmem:[#allocation5 + $0x5e8] sm:$0xff]
    %v236 = vld [vmem:[#allocation5 + $0x5f0] sm:$0xff]
    %v237 = vld [vmem:[#allocation5 + $0x5f8] sm:$0xff]
    %v238 = vld [vmem:[#allocation5 + $0x600] sm:$0xff]
    %v239 = vld [vmem:[#allocation5 + $0x608] sm:$0xff]
    %v240 = vld [vmem:[#allocation5 + $0x610] sm:$0xff]
    %v241 = vld [vmem:[#allocation5 + $0x618] sm:$0xff]
    %v242 = vld [vmem:[#allocation5 + $0x620] sm:$0xff]
    %v243 = vld [vmem:[#allocation5 + $0x628] sm:$0xff]
    %v244 = vld [vmem:[#allocation5 + $0x630] sm:$0xff]
    %v245 = vld [vmem:[#allocation5 + $0x638] sm:$0xff]
    %v246 = vld [vmem:[#allocation5 + $0x640] sm:$0xff]
    %v247 = vld [vmem:[#allocation5 + $0x648] sm:$0xff]
    %v248 = vld [vmem:[#allocation5 + $0x650] sm:$0xff]
    %v249 = vld [vmem:[#allocation5 + $0x658] sm:$0xff]
    %v250 = vld [vmem:[#allocation5 + $0x660] sm:$0xff]
    %v251 = vld [vmem:[#allocation5 + $0x668] sm:$0xff]
    %v252 = vld [vmem:[#allocation5 + $0x670] sm:$0xff]
    %v253 = vld [vmem:[#allocation5 + $0x678] sm:$0xff]
    %v254 = vld [vmem:[#allocation5 + $0x680] sm:$0xff]
    %v255 = vld [vmem:[#allocation5 + $0x688] sm:$0xff]
    %v256 = vld [vmem:[#allocation5 + $0x690] sm:$0xff]
    %v257 = vld [vmem:[#allocation5 + $0x698] sm:$0xff]
    %v258 = vld [vmem:[#allocation5 + $0x6a0] sm:$0xff]
    %v259 = vld [vmem:[#allocation5 + $0x6a8] sm:$0xff]
    %v260 = vld [vmem:[#allocation5 + $0x6b0] sm:$0xff]
    %v261 = vld [vmem:[#allocation5 + $0x6b8] sm:$0xff]
    %v262 = vld [vmem:[#allocation5 + $0x6c0] sm:$0xff]
    %v263 = vld [vmem:[#allocation5 + $0x6c8] sm:$0xff]
    %v264 = vld [vmem:[#allocation5 + $0x6d0] sm:$0xff]
    %v265 = vld [vmem:[#allocation5 + $0x6d8] sm:$0xff]
    %v266 = vld [vmem:[#allocation5 + $0x6e0] sm:$0xff]
    %v267 = vld [vmem:[#allocation5 + $0x6e8] sm:$0xff]
    %v268 = vld [vmem:[#allocation5 + $0x6f0] sm:$0xff]
    %v269 = vld [vmem:[#allocation5 + $0x6f8] sm:$0xff]
    %v270 = vld [vmem:[#allocation5 + $0x700] sm:$0xff]
    %v271 = vld [vmem:[#allocation5 + $0x708] sm:$0xff]
    %v272 = vld [vmem:[#allocation5 + $0x710] sm:$0xff]
    %v273 = vld [vmem:[#allocation5 + $0x718] sm:$0xff]
    %v274 = vld [vmem:[#allocation5 + $0x720] sm:$0xff]
    %v275 = vld [vmem:[#allocation5 + $0x728] sm:$0xff]
    %v276 = vld [vmem:[#allocation5 + $0x730] sm:$0xff]
    %v277 = vld [vmem:[#allocation5 + $0x738] sm:$0xff]
    %v278 = vld [vmem:[#allocation5 + $0x740] sm:$0xff]
    %v279 = vld [vmem:[#allocation5 + $0x748] sm:$0xff]
    %v280 = vld [vmem:[#allocation5 + $0x750] sm:$0xff]
    %v281 = vld [vmem:[#allocation5 + $0x758] sm:$0xff]
    %v282 = vld [vmem:[#allocation5 + $0x760] sm:$0xff]
    %v283 = vld [vmem:[#allocation5 + $0x768] sm:$0xff]
    %v284 = vld [vmem:[#allocation5 + $0x770] sm:$0xff]
    %v285 = vld [vmem:[#allocation5 + $0x778] sm:$0xff]
    %v286 = vld [vmem:[#allocation5 + $0x780] sm:$0xff]
    %v287 = vld [vmem:[#allocation5 + $0x788] sm:$0xff]
    %v288 = vld [vmem:[#allocation5 + $0x790] sm:$0xff]
    %v289 = vld [vmem:[#allocation5 + $0x798] sm:$0xff]
    %v290 = vld [vmem:[#allocation5 + $0x7a0] sm:$0xff]
    %v291 = vld [vmem:[#allocation5 + $0x7a8] sm:$0xff]
    %v292 = vld [vmem:[#allocation5 + $0x7b0] sm:$0xff]
    %v293 = vld [vmem:[#allocation5 + $0x7b8] sm:$0xff]
    %v294 = vld [vmem:[#allocation5 + $0x7c0] sm:$0xff]
    %v295 = vld [vmem:[#allocation5 + $0x7c8] sm:$0xff]
    %v296 = vld [vmem:[#allocation5 + $0x7d0] sm:$0xff]
    %v297 = vld [vmem:[#allocation5 + $0x7d8] sm:$0xff]
    %v298 = vld [vmem:[#allocation5 + $0x7e0] sm:$0xff]
    %v299 = vld [vmem:[#allocation5 + $0x7e8] sm:$0xff]
    %v300 = vld [vmem:[#allocation5 + $0x7f0] sm:$0xff]
    %v301 = vld [vmem:[#allocation5 + $0x7f8] sm:$0xff]
    %v302 = vld [vmem:[#allocation5 + $0x800] sm:$0xff]
    %v303 = vld [vmem:[#allocation5 + $0x808] sm:$0xff]
    %v304 = vld [vmem:[#allocation5 + $0x810] sm:$0xff]
    %v305 = vld [vmem:[#allocation5 + $0x818] sm:$0xff]
    %v306 = vld [vmem:[#allocation5 + $0x820] sm:$0xff]
    %v307 = vld [vmem:[#allocation5 + $0x828] sm:$0xff]
    %v308 = vld [vmem:[#allocation5 + $0x830] sm:$0xff]
    %v309 = vld [vmem:[#allocation5 + $0x838] sm:$0xff]
    %v310 = vld [vmem:[#allocation5 + $0x840] sm:$0xff]
    %v311 = vld [vmem:[#allocation5 + $0x848] sm:$0xff]
    %v312 = vld [vmem:[#allocation5 + $0x850] sm:$0xff]
    %v313 = vld [vmem:[#allocation5 + $0x858] sm:$0xff]
    %v314 = vld [vmem:[#allocation5 + $0x860] sm:$0xff]
    %v315 = vld [vmem:[#allocation5 + $0x868] sm:$0xff]
    %v316 = vld [vmem:[#allocation5 + $0x870] sm:$0xff]
    %v317 = vld [vmem:[#allocation5 + $0x878] sm:$0xff]
    %v318 = vld [vmem:[#allocation5 + $0x880] sm:$0xff]
    %v319 = vld [vmem:[#allocation5 + $0x888] sm:$0xff]
    %v320 = vld [vmem:[#allocation5 + $0x890] sm:$0xff]
    %v321 = vld [vmem:[#allocation5 + $0x898] sm:$0xff]
    %v322 = vld [vmem:[#allocation5 + $0x8a0] sm:$0xff]
    %v323 = vld [vmem:[#allocation5 + $0x8a8] sm:$0xff]
    %v324 = vld [vmem:[#allocation5 + $0x8b0] sm:$0xff]
    %v325 = vld [vmem:[#allocation5 + $0x8b8] sm:$0xff]
    %v326 = vld [vmem:[#allocation5 + $0x8c0] sm:$0xff]
    %v327 = vld [vmem:[#allocation5 + $0x8c8] sm:$0xff]
    %v328 = vld [vmem:[#allocation5 + $0x8d0] sm:$0xff]
    %v329 = vld [vmem:[#allocation5 + $0x8d8] sm:$0xff]
    %v330 = vld [vmem:[#allocation5 + $0x8e0] sm:$0xff]
    %v331 = vld [vmem:[#allocation5 + $0x8e8] sm:$0xff]
    %v332 = vld [vmem:[#allocation5 + $0x8f0] sm:$0xff]
    %v333 = vld [vmem:[#allocation5 + $0x8f8] sm:$0xff]
    %v334 = vld [vmem:[#allocation5 + $0x900] sm:$0xff]
    %v335 = vld [vmem:[#allocation5 + $0x908] sm:$0xff]
    %v336 = vld [vmem:[#allocation5 + $0x910] sm:$0xff]
    %v337 = vld [vmem:[#allocation5 + $0x918] sm:$0xff]
    %v338 = vld [vmem:[#allocation5 + $0x920] sm:$0xff]
    %v339 = vld [vmem:[#allocation5 + $0x928] sm:$0xff]
    %v340 = vld [vmem:[#allocation5 + $0x930] sm:$0xff]
    %v341 = vld [vmem:[#allocation5 + $0x938] sm:$0xff]
    %v342 = vld [vmem:[#allocation5 + $0x940] sm:$0xff]
    %v343 = vld [vmem:[#allocation5 + $0x948] sm:$0xff]
    %v344 = vld [vmem:[#allocation5 + $0x950] sm:$0xff]
    %v345 = vld [vmem:[#allocation5 + $0x958] sm:$0xff]
    %v346 = vld [vmem:[#allocation5 + $0x960] sm:$0xff]
    %v347 = vld [vmem:[#allocation5 + $0x968] sm:$0xff]
    %v348 = vld [vmem:[#allocation5 + $0x970] sm:$0xff]
    %v349 = vld [vmem:[#allocation5 + $0x978] sm:$0xff]
    %v350 = vld [vmem:[#allocation5 + $0x980] sm:$0xff]
    %v351 = vld [vmem:[#allocation5 + $0x988] sm:$0xff]
    %v352 = vld [vmem:[#allocation5 + $0x990] sm:$0xff]
    %v353 = vld [vmem:[#allocation5 + $0x998] sm:$0xff]
    %v354 = vld [vmem:[#allocation5 + $0x9a0] sm:$0xff]
    %v355 = vld [vmem:[#allocation5 + $0x9a8] sm:$0xff]
    %v356 = vld [vmem:[#allocation5 + $0x9b0] sm:$0xff]
    %v357 = vld [vmem:[#allocation5 + $0x9b8] sm:$0xff]
    %v358 = vld [vmem:[#allocation5 + $0x9c0] sm:$0xff]
    %v359 = vld [vmem:[#allocation5 + $0x9c8] sm:$0xff]
    %v360 = vld [vmem:[#allocation5 + $0x9d0] sm:$0xff]
    %v361 = vld [vmem:[#allocation5 + $0x9d8] sm:$0xff]
    %v362 = vld [vmem:[#allocation5 + $0x9e0] sm:$0xff]
    %v363 = vld [vmem:[#allocation5 + $0x9e8] sm:$0xff]
    %v364 = vld [vmem:[#allocation5 + $0x9f0] sm:$0xff]
    %v365 = vld [vmem:[#allocation5 + $0x9f8] sm:$0xff]
    %v366 = vld [vmem:[#allocation5 + $0xa00] sm:$0xff]
    %v367 = vld [vmem:[#allocation5 + $0xa08] sm:$0xff]
    %v368 = vld [vmem:[#allocation5 + $0xa10] sm:$0xff]
    %v369 = vld [vmem:[#allocation5 + $0xa18] sm:$0xff]
    %v370 = vld [vmem:[#allocation5 + $0xa20] sm:$0xff]
    %v371 = vld [vmem:[#allocation5 + $0xa28] sm:$0xff]
    %v372 = vld [vmem:[#allocation5 + $0xa30] sm:$0xff]
    %v373 = vld [vmem:[#allocation5 + $0xa38] sm:$0xff]
    %v374 = vld [vmem:[#allocation5 + $0xa40] sm:$0xff]
    %v375 = vld [vmem:[#allocation5 + $0xa48] sm:$0xff]
    %v376 = vld [vmem:[#allocation5 + $0xa50] sm:$0xff]
    %v377 = vld [vmem:[#allocation5 + $0xa58] sm:$0xff]
    %v378 = vld [vmem:[#allocation5 + $0xa60] sm:$0xff]
    %v379 = vld [vmem:[#allocation5 + $0xa68] sm:$0xff]
    %v380 = vld [vmem:[#allocation5 + $0xa70] sm:$0xff]
    %v381 = vld [vmem:[#allocation5 + $0xa78] sm:$0xff]
    %v382 = vld [vmem:[#allocation5 + $0xa80] sm:$0xff]
    %v383 = vld [vmem:[#allocation5 + $0xa88] sm:$0xff]
    %v384 = vld [vmem:[#allocation5 + $0xa90] sm:$0xff]
    %v385 = vld [vmem:[#allocation5 + $0xa98] sm:$0xff]
    %v386 = vld [vmem:[#allocation5 + $0xaa0] sm:$0xff]
    %v387 = vld [vmem:[#allocation5 + $0xaa8] sm:$0xff]
    %v388 = vld [vmem:[#allocation5 + $0xab0] sm:$0xff]
    %v389 = vld [vmem:[#allocation5 + $0xab8] sm:$0xff]
    %v390 = vld [vmem:[#allocation5 + $0xac0] sm:$0xff]
    %v391 = vld [vmem:[#allocation5 + $0xac8] sm:$0xff]
    %v392 = vld [vmem:[#allocation5 + $0xad0] sm:$0xff]
    %v393 = vld [vmem:[#allocation5 + $0xad8] sm:$0xff]
    %v394 = vld [vmem:[#allocation5 + $0xae0] sm:$0xff]
    %v395 = vld [vmem:[#allocation5 + $0xae8] sm:$0xff]
    %v396 = vld [vmem:[#allocation5 + $0xaf0] sm:$0xff]
    %v397 = vld [vmem:[#allocation5 + $0xaf8] sm:$0xff]
    %v398 = vld [vmem:[#allocation5 + $0xb00] sm:$0xff]
    %v399 = vld [vmem:[#allocation5 + $0xb08] sm:$0xff]
    %v400 = vld [vmem:[#allocation5 + $0xb10] sm:$0xff]
    %v401 = vld [vmem:[#allocation5 + $0xb18] sm:$0xff]
    %v402 = vld [vmem:[#allocation5 + $0xb20] sm:$0xff]
    %v403 = vld [vmem:[#allocation5 + $0xb28] sm:$0xff]
    %v404 = vld [vmem:[#allocation5 + $0xb30] sm:$0xff]
    %v405 = vld [vmem:[#allocation5 + $0xb38] sm:$0xff]
    %v406 = vld [vmem:[#allocation5 + $0xb40] sm:$0xff]
    %v407 = vld [vmem:[#allocation5 + $0xb48] sm:$0xff]
    %v408 = vld [vmem:[#allocation5 + $0xb50] sm:$0xff]
    %v409 = vld [vmem:[#allocation5 + $0xb58] sm:$0xff]
    %v410 = vld [vmem:[#allocation5 + $0xb60] sm:$0xff]
    %v411 = vld [vmem:[#allocation5 + $0xb68] sm:$0xff]
    %v412 = vld [vmem:[#allocation5 + $0xb70] sm:$0xff]
    %v413 = vld [vmem:[#allocation5 + $0xb78] sm:$0xff]
    %v414 = vld [vmem:[#allocation5 + $0xb80] sm:$0xff]
    %v415 = vld [vmem:[#allocation5 + $0xb88] sm:$0xff]
    %v416 = vld [vmem:[#allocation5 + $0xb90] sm:$0xff]
    %v417 = vld [vmem:[#allocation5 + $0xb98] sm:$0xff]
    %v418 = vld [vmem:[#allocation5 + $0xba0] sm:$0xff]
    %v419 = vld [vmem:[#allocation5 + $0xba8] sm:$0xff]
    %v420 = vld [vmem:[#allocation5 + $0xbb0] sm:$0xff]
    %v421 = vld [vmem:[#allocation5 + $0xbb8] sm:$0xff]
    %v422 = vld [vmem:[#allocation5 + $0xbc0] sm:$0xff]
    %v423 = vld [vmem:[#allocation5 + $0xbc8] sm:$0xff]
    %v424 = vld [vmem:[#allocation5 + $0xbd0] sm:$0xff]
    %v425 = vld [vmem:[#allocation5 + $0xbd8] sm:$0xff]
    %v426 = vld [vmem:[#allocation5 + $0xbe0] sm:$0xff]
    %v427 = vld [vmem:[#allocation5 + $0xbe8] sm:$0xff]
    %v428 = vld [vmem:[#allocation5 + $0xbf0] sm:$0xff]
    %v429 = vld [vmem:[#allocation5 + $0xbf8] sm:$0xff]
    %v430 = vld [vmem:[#allocation5 + $0xc00] sm:$0xff]
    %v431 = vld [vmem:[#allocation5 + $0xc08] sm:$0xff]
    %v432 = vld [vmem:[#allocation5 + $0xc10] sm:$0xff]
    %v433 = vld [vmem:[#allocation5 + $0xc18] sm:$0xff]
    %v434 = vld [vmem:[#allocation5 + $0xc20] sm:$0xff]
    %v435 = vld [vmem:[#allocation5 + $0xc28] sm:$0xff]
    %v436 = vld [vmem:[#allocation5 + $0xc30] sm:$0xff]
    %v437 = vld [vmem:[#allocation5 + $0xc38] sm:$0xff]
    %v438 = vld [vmem:[#allocation5 + $0xc40] sm:$0xff]
    %v439 = vld [vmem:[#allocation5 + $0xc48] sm:$0xff]
    %v440 = vld [vmem:[#allocation5 + $0xc50] sm:$0xff]
    %v441 = vld [vmem:[#allocation5 + $0xc58] sm:$0xff]
    %v442 = vld [vmem:[#allocation5 + $0xc60] sm:$0xff]
    %v443 = vld [vmem:[#allocation5 + $0xc68] sm:$0xff]
    %v444 = vld [vmem:[#allocation5 + $0xc70] sm:$0xff]
    %v445 = vld [vmem:[#allocation5 + $0xc78] sm:$0xff]
    %v446 = vld [vmem:[#allocation5 + $0xc80] sm:$0xff]
    %v447 = vld [vmem:[#allocation5 + $0xc88] sm:$0xff]
    %v448 = vld [vmem:[#allocation5 + $0xc90] sm:$0xff]
    %v449 = vld [vmem:[#allocation5 + $0xc98] sm:$0xff]
    %v450 = vld [vmem:[#allocation5 + $0xca0] sm:$0xff]
    %v451 = vld [vmem:[#allocation5 + $0xca8] sm:$0xff]
    %v452 = vld [vmem:[#allocation5 + $0xcb0] sm:$0xff]
    %v453 = vld [vmem:[#allocation5 + $0xcb8] sm:$0xff]
    %v454 = vld [vmem:[#allocation5 + $0xcc0] sm:$0xff]
    %v455 = vld [vmem:[#allocation5 + $0xcc8] sm:$0xff]
    %v456 = vld [vmem:[#allocation5 + $0xcd0] sm:$0xff]
    %v457 = vld [vmem:[#allocation5 + $0xcd8] sm:$0xff]
    %v458 = vld [vmem:[#allocation5 + $0xce0] sm:$0xff]
    %v459 = vld [vmem:[#allocation5 + $0xce8] sm:$0xff]
    %v460 = vld [vmem:[#allocation5 + $0xcf0] sm:$0xff]
    %v461 = vld [vmem:[#allocation5 + $0xcf8] sm:$0xff]
    %v462 = vld [vmem:[#allocation5 + $0xd00] sm:$0xff]
    %v463 = vld [vmem:[#allocation5 + $0xd08] sm:$0xff]
    %v464 = vld [vmem:[#allocation5 + $0xd10] sm:$0xff]
    %v465 = vld [vmem:[#allocation5 + $0xd18] sm:$0xff]
    %v466 = vld [vmem:[#allocation5 + $0xd20] sm:$0xff]
    %v467 = vld [vmem:[#allocation5 + $0xd28] sm:$0xff]
    %v468 = vld [vmem:[#allocation5 + $0xd30] sm:$0xff]
    %v469 = vld [vmem:[#allocation5 + $0xd38] sm:$0xff]
    %v470 = vld [vmem:[#allocation5 + $0xd40] sm:$0xff]
    %v471 = vld [vmem:[#allocation5 + $0xd48] sm:$0xff]
    %v472 = vld [vmem:[#allocation5 + $0xd50] sm:$0xff]
    %v473 = vld [vmem:[#allocation5 + $0xd58] sm:$0xff]
    %v474 = vld [vmem:[#allocation5 + $0xd60] sm:$0xff]
    %v475 = vld [vmem:[#allocation5 + $0xd68] sm:$0xff]
    %v476 = vld [vmem:[#allocation5 + $0xd70] sm:$0xff]
    %v477 = vld [vmem:[#allocation5 + $0xd78] sm:$0xff]
    %v478 = vld [vmem:[#allocation5 + $0xd80] sm:$0xff]
    %v479 = vld [vmem:[#allocation5 + $0xd88] sm:$0xff]
    %v480 = vld [vmem:[#allocation5 + $0xd90] sm:$0xff]
    %v481 = vld [vmem:[#allocation5 + $0xd98] sm:$0xff]
    %v482 = vld [vmem:[#allocation5 + $0xda0] sm:$0xff]
    %v483 = vld [vmem:[#allocation5 + $0xda8] sm:$0xff]
    %v484 = vld [vmem:[#allocation5 + $0xdb0] sm:$0xff]
    %v485 = vld [vmem:[#allocation5 + $0xdb8] sm:$0xff]
    %v486 = vld [vmem:[#allocation5 + $0xdc0] sm:$0xff]
    %v487 = vld [vmem:[#allocation5 + $0xdc8] sm:$0xff]
    %v488 = vld [vmem:[#allocation5 + $0xdd0] sm:$0xff]
    %v489 = vld [vmem:[#allocation5 + $0xdd8] sm:$0xff]
    %v490 = vld [vmem:[#allocation5 + $0xde0] sm:$0xff]
    %v491 = vld [vmem:[#allocation5 + $0xde8] sm:$0xff]
    %v492 = vld [vmem:[#allocation5 + $0xdf0] sm:$0xff]
    %v493 = vld [vmem:[#allocation5 + $0xdf8] sm:$0xff]
    %v494 = vld [vmem:[#allocation5 + $0xe00] sm:$0xff]
    %v495 = vld [vmem:[#allocation5 + $0xe08] sm:$0xff]
    %v496 = vld [vmem:[#allocation5 + $0xe10] sm:$0xff]
    %v497 = vld [vmem:[#allocation5 + $0xe18] sm:$0xff]
    %v498 = vld [vmem:[#allocation5 + $0xe20] sm:$0xff]
    %v499 = vld [vmem:[#allocation5 + $0xe28] sm:$0xff]
    %v500 = vld [vmem:[#allocation5 + $0xe30] sm:$0xff]
    %v501 = vld [vmem:[#allocation5 + $0xe38] sm:$0xff]
    %v502 = vld [vmem:[#allocation5 + $0xe40] sm:$0xff]
    %v503 = vld [vmem:[#allocation5 + $0xe48] sm:$0xff]
    %v504 = vld [vmem:[#allocation5 + $0xe50] sm:$0xff]
    %v505 = vld [vmem:[#allocation5 + $0xe58] sm:$0xff]
    %v506 = vld [vmem:[#allocation5 + $0xe60] sm:$0xff]
    %v507 = vld [vmem:[#allocation5 + $0xe68] sm:$0xff]
    %v508 = vld [vmem:[#allocation5 + $0xe70] sm:$0xff]
    %v509 = vld [vmem:[#allocation5 + $0xe78] sm:$0xff]
    %v510 = vld [vmem:[#allocation5 + $0xe80] sm:$0xff]
    %v511 = vld [vmem:[#allocation5 + $0xe88] sm:$0xff]
    %v512 = vld [vmem:[#allocation5 + $0xe90] sm:$0xff]
    %v513 = vld [vmem:[#allocation5 + $0xe98] sm:$0xff]
    %v514 = vld [vmem:[#allocation5 + $0xea0] sm:$0xff]
    %v515 = vld [vmem:[#allocation5 + $0xea8] sm:$0xff]
    %v516 = vld [vmem:[#allocation5 + $0xeb0] sm:$0xff]
    %v517 = vld [vmem:[#allocation5 + $0xeb8] sm:$0xff]
    %v518 = vld [vmem:[#allocation5 + $0xec0] sm:$0xff]
    %v519 = vld [vmem:[#allocation5 + $0xec8] sm:$0xff]
    %v520 = vld [vmem:[#allocation5 + $0xed0] sm:$0xff]
    %v521 = vld [vmem:[#allocation5 + $0xed8] sm:$0xff]
    %v522 = vld [vmem:[#allocation5 + $0xee0] sm:$0xff]
    %v523 = vld [vmem:[#allocation5 + $0xee8] sm:$0xff]
    %v524 = vld [vmem:[#allocation5 + $0xef0] sm:$0xff]
    %v525 = vld [vmem:[#allocation5 + $0xef8] sm:$0xff]
    %v526 = vld [vmem:[#allocation5 + $0xf00] sm:$0xff]
    %v527 = vld [vmem:[#allocation5 + $0xf08] sm:$0xff]
    %v528 = vld [vmem:[#allocation5 + $0xf10] sm:$0xff]
    %v529 = vld [vmem:[#allocation5 + $0xf18] sm:$0xff]
    %v530 = vld [vmem:[#allocation5 + $0xf20] sm:$0xff]
    %v531 = vld [vmem:[#allocation5 + $0xf28] sm:$0xff]
    %v532 = vld [vmem:[#allocation5 + $0xf30] sm:$0xff]
    %v533 = vld [vmem:[#allocation5 + $0xf38] sm:$0xff]
    %v534 = vld [vmem:[#allocation5 + $0xf40] sm:$0xff]
    %v535 = vld [vmem:[#allocation5 + $0xf48] sm:$0xff]
    %v536 = vld [vmem:[#allocation5 + $0xf50] sm:$0xff]
    %v537 = vld [vmem:[#allocation5 + $0xf58] sm:$0xff]
    %v538 = vld [vmem:[#allocation5 + $0xf60] sm:$0xff]
    %v539 = vld [vmem:[#allocation5 + $0xf68] sm:$0xff]
    %v540 = vld [vmem:[#allocation5 + $0xf70] sm:$0xff]
    %v541 = vld [vmem:[#allocation5 + $0xf78] sm:$0xff]
    %v542 = vld [vmem:[#allocation5 + $0xf80] sm:$0xff]
    %v543 = vld [vmem:[#allocation5 + $0xf88] sm:$0xff]
    %v544 = vld [vmem:[#allocation5 + $0xf90] sm:$0xff]
    %v545 = vld [vmem:[#allocation5 + $0xf98] sm:$0xff]
    %v546 = vld [vmem:[#allocation5 + $0xfa0] sm:$0xff]
    %v547 = vld [vmem:[#allocation5 + $0xfa8] sm:$0xff]
    %v548 = vld [vmem:[#allocation5 + $0xfb0] sm:$0xff]
    %v549 = vld [vmem:[#allocation5 + $0xfb8] sm:$0xff]
    %v550 = vld [vmem:[#allocation5 + $0xfc0] sm:$0xff]
    %v551 = vld [vmem:[#allocation5 + $0xfc8] sm:$0xff]
    %v552 = vld [vmem:[#allocation5 + $0xfd0] sm:$0xff]
    %v553 = vld [vmem:[#allocation5 + $0xfd8] sm:$0xff]
    %v554 = vld [vmem:[#allocation5 + $0xfe0] sm:$0xff]
    %v555 = vld [vmem:[#allocation5 + $0xfe8] sm:$0xff]
    %v556 = vld [vmem:[#allocation5 + $0xff0] sm:$0xff]
    %v557 = vld [vmem:[#allocation5 + $0xff8] sm:$0xff]
    %558 = vmatprep.subr.mxu0 %v47
    %559 = vmatpush1.msra.mxu0 %v46
    %560 = vmatprep.subr.mxu0 %v51
    %561 = vmatpush1.msra.mxu0 %v50
    %562 = vmatprep.subr.mxu0 %v55
    %563 = vmatpush1.msra.mxu0 %v54
    %564 = vmatprep.subr.mxu0 %v59
    %565 = vmatpush1.msra.mxu0 %v58
    %566 = vmatprep.subr.mxu0 %v63
    %567 = vmatpush1.msra.mxu0 %v62
    %568 = vmatprep.subr.mxu0 %v67
    %569 = vmatpush1.msra.mxu0 %v66
    %570 = vmatprep.subr.mxu0 %v71
    %571 = vmatpush1.msra.mxu0 %v70
    %572 = vmatprep.subr.mxu0 %v75
    %573 = vmatpush1.msra.mxu0 %v74
    %574 = vmatprep.subr.mxu0 %v79
    %575 = vmatpush1.msra.mxu0 %v78
    %576 = vmatprep.subr.mxu0 %v83
    %577 = vmatpush1.msra.mxu0 %v82
    %578 = vmatprep.subr.mxu0 %v87
    %579 = vmatpush1.msra.mxu0 %v86
    %580 = vmatprep.subr.mxu0 %v91
    %581 = vmatpush1.msra.mxu0 %v90
    %582 = vmatprep.subr.mxu0 %v95
    %583 = vmatpush1.msra.mxu0 %v94
    %584 = vmatprep.subr.mxu0 %v99
    %585 = vmatpush1.msra.mxu0 %v98
    %586 = vmatprep.subr.mxu0 %v103
    %587 = vmatpush1.msra.mxu0 %v102
    %588 = vmatprep.subr.mxu0 %v107
    %589 = vmatpush1.msra.mxu0 %v106
    %590 = vmatprep.subr.mxu0 %v111
    %591 = vmatpush1.msra.mxu0 %v110
    %592 = vmatprep.subr.mxu0 %v115
    %593 = vmatpush1.msra.mxu0 %v114
    %594 = vmatprep.subr.mxu0 %v119
    %595 = vmatpush1.msra.mxu0 %v118
    %596 = vmatprep.subr.mxu0 %v123
    %597 = vmatpush1.msra.mxu0 %v122
    %598 = vmatprep.subr.mxu0 %v127
    %599 = vmatpush1.msra.mxu0 %v126
    %600 = vmatprep.subr.mxu0 %v131
    %601 = vmatpush1.msra.mxu0 %v130
    %602 = vmatprep.subr.mxu0 %v135
    %603 = vmatpush1.msra.mxu0 %v134
    %604 = vmatprep.subr.mxu0 %v139
    %605 = vmatpush1.msra.mxu0 %v138
    %606 = vmatprep.subr.mxu0 %v143
    %607 = vmatpush1.msra.mxu0 %v142
    %608 = vmatprep.subr.mxu0 %v147
    %609 = vmatpush1.msra.mxu0 %v146
    %610 = vmatprep.subr.mxu0 %v151
    %611 = vmatpush1.msra.mxu0 %v150
    %612 = vmatprep.subr.mxu0 %v155
    %613 = vmatpush1.msra.mxu0 %v154
    %614 = vmatprep.subr.mxu0 %v159
    %615 = vmatpush1.msra.mxu0 %v158
    %616 = vmatprep.subr.mxu0 %v163
    %617 = vmatpush1.msra.mxu0 %v162
    %618 = vmatprep.subr.mxu0 %v167
    %619 = vmatpush1.msra.mxu0 %v166
    %620 = vmatprep.subr.mxu0 %v171
    %621 = vmatpush1.msra.mxu0 %v170
    %622 = vmatprep.mubr.f32.mxu0 %v39
    %623 = vmatmul.mubr.f32.gmra.mrb[0].mxu0 %v38
    %v624 = vpop.f32.mrb[0].mxu0
    %v625 = vadd.f32 0.0, %v624
    %v626 = vpop.f32.mrb[0].mxu0
    %v627 = vadd.f32 0.0, %v626
    %628 = vdwg.mxu0
    %629 = vmatprep.subr.mxu0 %v175
    %630 = vmatpush1.msra.mxu0 %v174
    %631 = vmatprep.subr.mxu0 %v179
    %632 = vmatpush1.msra.mxu0 %v178
    %633 = vmatprep.subr.mxu0 %v183
    %634 = vmatpush1.msra.mxu0 %v182
    %635 = vmatprep.subr.mxu0 %v187
    %636 = vmatpush1.msra.mxu0 %v186
    %637 = vmatprep.subr.mxu0 %v191
    %638 = vmatpush1.msra.mxu0 %v190
    %639 = vmatprep.subr.mxu0 %v195
    %640 = vmatpush1.msra.mxu0 %v194
    %641 = vmatprep.subr.mxu0 %v199
    %642 = vmatpush1.msra.mxu0 %v198
    %643 = vmatprep.subr.mxu0 %v203
    %644 = vmatpush1.msra.mxu0 %v202
    %645 = vmatprep.subr.mxu0 %v207
    %646 = vmatpush1.msra.mxu0 %v206
    %647 = vmatprep.subr.mxu0 %v211
    %648 = vmatpush1.msra.mxu0 %v210
    %649 = vmatprep.subr.mxu0 %v215
    %650 = vmatpush1.msra.mxu0 %v214
    %651 = vmatprep.subr.mxu0 %v219
    %652 = vmatpush1.msra.mxu0 %v218
    %653 = vmatprep.subr.mxu0 %v223
    %654 = vmatpush1.msra.mxu0 %v222
    %655 = vmatprep.subr.mxu0 %v227
    %656 = vmatpush1.msra.mxu0 %v226
    %657 = vmatprep.subr.mxu0 %v231
    %658 = vmatpush1.msra.mxu0 %v230
    %659 = vmatprep.subr.mxu0 %v235
    %660 = vmatpush1.msra.mxu0 %v234
    %661 = vmatprep.subr.mxu0 %v239
    %662 = vmatpush1.msra.mxu0 %v238
    %663 = vmatprep.subr.mxu0 %v243
    %664 = vmatpush1.msra.mxu0 %v242
    %665 = vmatprep.subr.mxu0 %v247
    %666 = vmatpush1.msra.mxu0 %v246
    %667 = vmatprep.subr.mxu0 %v251
    %668 = vmatpush1.msra.mxu0 %v250
    %669 = vmatprep.subr.mxu0 %v255
    %670 = vmatpush1.msra.mxu0 %v254
    %671 = vmatprep.subr.mxu0 %v259
    %672 = vmatpush1.msra.mxu0 %v258
    %673 = vmatprep.subr.mxu0 %v263
    %674 = vmatpush1.msra.mxu0 %v262
    %675 = vmatprep.subr.mxu0 %v267
    %676 = vmatpush1.msra.mxu0 %v266
    %677 = vmatprep.subr.mxu0 %v271
    %678 = vmatpush1.msra.mxu0 %v270
    %679 = vmatprep.subr.mxu0 %v275
    %680 = vmatpush1.msra.mxu0 %v274
    %681 = vmatprep.subr.mxu0 %v279
    %682 = vmatpush1.msra.mxu0 %v278
    %683 = vmatprep.subr.mxu0 %v283
    %684 = vmatpush1.msra.mxu0 %v282
    %685 = vmatprep.subr.mxu0 %v287
    %686 = vmatpush1.msra.mxu0 %v286
    %687 = vmatprep.subr.mxu0 %v291
    %688 = vmatpush1.msra.mxu0 %v290
    %689 = vmatprep.subr.mxu0 %v295
    %690 = vmatpush1.msra.mxu0 %v294
    %691 = vmatprep.subr.mxu0 %v299
    %692 = vmatpush1.msra.mxu0 %v298
    %693 = vmatprep.mubr.f32.mxu0 %v41
    %694 = vmatmul.mubr.f32.gmra.mrb[0].mxu0 %v40
    %v695 = vpop.f32.mrb[0].mxu0
    %v696 = vadd.f32 %v625, %v695
    %v697 = vpop.f32.mrb[0].mxu0
    %v698 = vadd.f32 %v627, %v697
    %699 = vdwg.mxu0
    %700 = vmatprep.subr.mxu0 %v303
    %701 = vmatpush1.msra.mxu0 %v302
    %702 = vmatprep.subr.mxu0 %v307
    %703 = vmatpush1.msra.mxu0 %v306
    %704 = vmatprep.subr.mxu0 %v311
    %705 = vmatpush1.msra.mxu0 %v310
    %706 = vmatprep.subr.mxu0 %v315
    %707 = vmatpush1.msra.mxu0 %v314
    %708 = vmatprep.subr.mxu0 %v319
    %709 = vmatpush1.msra.mxu0 %v318
    %710 = vmatprep.subr.mxu0 %v323
    %711 = vmatpush1.msra.mxu0 %v322
    %712 = vmatprep.subr.mxu0 %v327
    %713 = vmatpush1.msra.mxu0 %v326
    %714 = vmatprep.subr.mxu0 %v331
    %715 = vmatpush1.msra.mxu0 %v330
    %716 = vmatprep.subr.mxu0 %v335
    %717 = vmatpush1.msra.mxu0 %v334
    %718 = vmatprep.subr.mxu0 %v339
    %719 = vmatpush1.msra.mxu0 %v338
    %720 = vmatprep.subr.mxu0 %v343
    %721 = vmatpush1.msra.mxu0 %v342
    %722 = vmatprep.subr.mxu0 %v347
    %723 = vmatpush1.msra.mxu0 %v346
    %724 = vmatprep.subr.mxu0 %v351
    %725 = vmatpush1.msra.mxu0 %v350
    %726 = vmatprep.subr.mxu0 %v355
    %727 = vmatpush1.msra.mxu0 %v354
    %728 = vmatprep.subr.mxu0 %v359
    %729 = vmatpush1.msra.mxu0 %v358
    %730 = vmatprep.subr.mxu0 %v363
    %731 = vmatpush1.msra.mxu0 %v362
    %732 = vmatprep.subr.mxu0 %v367
    %733 = vmatpush1.msra.mxu0 %v366
    %734 = vmatprep.subr.mxu0 %v371
    %735 = vmatpush1.msra.mxu0 %v370
    %736 = vmatprep.subr.mxu0 %v375
    %737 = vmatpush1.msra.mxu0 %v374
    %738 = vmatprep.subr.mxu0 %v379
    %739 = vmatpush1.msra.mxu0 %v378
    %740 = vmatprep.subr.mxu0 %v383
    %741 = vmatpush1.msra.mxu0 %v382
    %742 = vmatprep.subr.mxu0 %v387
    %743 = vmatpush1.msra.mxu0 %v386
    %744 = vmatprep.subr.mxu0 %v391
    %745 = vmatpush1.msra.mxu0 %v390
    %746 = vmatprep.subr.mxu0 %v395
    %747 = vmatpush1.msra.mxu0 %v394
    %748 = vmatprep.subr.mxu0 %v399
    %749 = vmatpush1.msra.mxu0 %v398
    %750 = vmatprep.subr.mxu0 %v403
    %751 = vmatpush1.msra.mxu0 %v402
    %752 = vmatprep.subr.mxu0 %v407
    %753 = vmatpush1.msra.mxu0 %v406
    %754 = vmatprep.subr.mxu0 %v411
    %755 = vmatpush1.msra.mxu0 %v410
    %756 = vmatprep.subr.mxu0 %v415
    %757 = vmatpush1.msra.mxu0 %v414
    %758 = vmatprep.subr.mxu0 %v419
    %759 = vmatpush1.msra.mxu0 %v418
    %760 = vmatprep.subr.mxu0 %v423
    %761 = vmatpush1.msra.mxu0 %v422
    %762 = vmatprep.subr.mxu0 %v427
    %763 = vmatpush1.msra.mxu0 %v426
    %764 = vmatprep.mubr.f32.mxu0 %v43
    %765 = vmatmul.mubr.f32.gmra.mrb[0].mxu0 %v42
    %v766 = vpop.f32.mrb[0].mxu0
    %v767 = vadd.f32 %v696, %v766
    %v768 = vpop.f32.mrb[0].mxu0
    %v769 = vadd.f32 %v698, %v768
    %770 = vdwg.mxu0
    %771 = vmatprep.subr.mxu0 %v431
    %772 = vmatpush1.msra.mxu0 %v430
    %773 = vmatprep.subr.mxu0 %v435
    %774 = vmatpush1.msra.mxu0 %v434
    %775 = vmatprep.subr.mxu0 %v439
    %776 = vmatpush1.msra.mxu0 %v438
    %777 = vmatprep.subr.mxu0 %v443
    %778 = vmatpush1.msra.mxu0 %v442
    %779 = vmatprep.subr.mxu0 %v447
    %780 = vmatpush1.msra.mxu0 %v446
    %781 = vmatprep.subr.mxu0 %v451
    %782 = vmatpush1.msra.mxu0 %v450
    %783 = vmatprep.subr.mxu0 %v455
    %784 = vmatpush1.msra.mxu0 %v454
    %785 = vmatprep.subr.mxu0 %v459
    %786 = vmatpush1.msra.mxu0 %v458
    %787 = vmatprep.subr.mxu0 %v463
    %788 = vmatpush1.msra.mxu0 %v462
    %789 = vmatprep.subr.mxu0 %v467
    %790 = vmatpush1.msra.mxu0 %v466
    %791 = vmatprep.subr.mxu0 %v471
    %792 = vmatpush1.msra.mxu0 %v470
    %793 = vmatprep.subr.mxu0 %v475
    %794 = vmatpush1.msra.mxu0 %v474
    %795 = vmatprep.subr.mxu0 %v479
    %796 = vmatpush1.msra.mxu0 %v478
    %797 = vmatprep.subr.mxu0 %v483
    %798 = vmatpush1.msra.mxu0 %v482
    %799 = vmatprep.subr.mxu0 %v487
    %800 = vmatpush1.msra.mxu0 %v486
    %801 = vmatprep.subr.mxu0 %v491
    %802 = vmatpush1.msra.mxu0 %v490
    %803 = vmatprep.subr.mxu0 %v495
    %804 = vmatpush1.msra.mxu0 %v494
    %805 = vmatprep.subr.mxu0 %v499
    %806 = vmatpush1.msra.mxu0 %v498
    %807 = vmatprep.subr.mxu0 %v503
    %808 = vmatpush1.msra.mxu0 %v502
    %809 = vmatprep.subr.mxu0 %v507
    %810 = vmatpush1.msra.mxu0 %v506
    %811 = vmatprep.subr.mxu0 %v511
    %812 = vmatpush1.msra.mxu0 %v510
    %813 = vmatprep.subr.mxu0 %v515
    %814 = vmatpush1.msra.mxu0 %v514
    %815 = vmatprep.subr.mxu0 %v519
    %816 = vmatpush1.msra.mxu0 %v518
    %817 = vmatprep.subr.mxu0 %v523
    %818 = vmatpush1.msra.mxu0 %v522
    %819 = vmatprep.subr.mxu0 %v527
    %820 = vmatpush1.msra.mxu0 %v526
    %821 = vmatprep.subr.mxu0 %v531
    %822 = vmatpush1.msra.mxu0 %v530
    %823 = vmatprep.subr.mxu0 %v535
    %824 = vmatpush1.msra.mxu0 %v534
    %825 = vmatprep.subr.mxu0 %v539
    %826 = vmatpush1.msra.mxu0 %v538
    %827 = vmatprep.subr.mxu0 %v543
    %828 = vmatpush1.msra.mxu0 %v542
    %829 = vmatprep.subr.mxu0 %v547
    %830 = vmatpush1.msra.mxu0 %v546
    %831 = vmatprep.subr.mxu0 %v551
    %832 = vmatpush1.msra.mxu0 %v550
    %833 = vmatprep.subr.mxu0 %v555
    %834 = vmatpush1.msra.mxu0 %v554
    %835 = vmatprep.mubr.f32.mxu0 %v45
    %836 = vmatmul.mubr.f32.gmra.mrb[0].mxu0 %v44
    %v837 = vpop.f32.mrb[0].mxu0
    %v838 = vadd.f32 %v767, %v837
    %v839 = vpop.f32.mrb[0].mxu0
    %v840 = vadd.f32 %v769, %v839
    %841 = vdwg.mxu0
    %842 = vmatprep.subr.mxu0 %v49
    %843 = vmatpush1.msra.mxu0 %v48
    %844 = vmatprep.subr.mxu0 %v53
    %845 = vmatpush1.msra.mxu0 %v52
    %846 = vmatprep.subr.mxu0 %v57
    %847 = vmatpush1.msra.mxu0 %v56
    %848 = vmatprep.subr.mxu0 %v61
    %849 = vmatpush1.msra.mxu0 %v60
    %850 = vmatprep.subr.mxu0 %v65
    %851 = vmatpush1.msra.mxu0 %v64
    %852 = vmatprep.subr.mxu0 %v69
    %853 = vmatpush1.msra.mxu0 %v68
    %854 = vmatprep.subr.mxu0 %v73
    %855 = vmatpush1.msra.mxu0 %v72
    %856 = vmatprep.subr.mxu0 %v77
    %857 = vmatpush1.msra.mxu0 %v76
    %858 = vmatprep.subr.mxu0 %v81
    %859 = vmatpush1.msra.mxu0 %v80
    %860 = vmatprep.subr.mxu0 %v85
    %861 = vmatpush1.msra.mxu0 %v84
    %862 = vmatprep.subr.mxu0 %v89
    %863 = vmatpush1.msra.mxu0 %v88
    %864 = vmatprep.subr.mxu0 %v93
    %865 = vmatpush1.msra.mxu0 %v92
    %866 = vmatprep.subr.mxu0 %v97
    %867 = vmatpush1.msra.mxu0 %v96
    %868 = vmatprep.subr.mxu0 %v101
    %869 = vmatpush1.msra.mxu0 %v100
    %870 = vmatprep.subr.mxu0 %v105
    %871 = vmatpush1.msra.mxu0 %v104
    %872 = vmatprep.subr.mxu0 %v109
    %873 = vmatpush1.msra.mxu0 %v108
    %874 = vmatprep.subr.mxu0 %v113
    %875 = vmatpush1.msra.mxu0 %v112
    %876 = vmatprep.subr.mxu0 %v117
    %877 = vmatpush1.msra.mxu0 %v116
    %878 = vmatprep.subr.mxu0 %v121
    %879 = vmatpush1.msra.mxu0 %v120
    %880 = vmatprep.subr.mxu0 %v125
    %881 = vmatpush1.msra.mxu0 %v124
    %882 = vmatprep.subr.mxu0 %v129
    %883 = vmatpush1.msra.mxu0 %v128
    %884 = vmatprep.subr.mxu0 %v133
    %885 = vmatpush1.msra.mxu0 %v132
    %886 = vmatprep.subr.mxu0 %v137
    %887 = vmatpush1.msra.mxu0 %v136
    %888 = vmatprep.subr.mxu0 %v141
    %889 = vmatpush1.msra.mxu0 %v140
    %890 = vmatprep.subr.mxu0 %v145
    %891 = vmatpush1.msra.mxu0 %v144
    %892 = vmatprep.subr.mxu0 %v149
    %893 = vmatpush1.msra.mxu0 %v148
    %894 = vmatprep.subr.mxu0 %v153
    %895 = vmatpush1.msra.mxu0 %v152
    %896 = vmatprep.subr.mxu0 %v157
    %897 = vmatpush1.msra.mxu0 %v156
    %898 = vmatprep.subr.mxu0 %v161
    %899 = vmatpush1.msra.mxu0 %v160
    %900 = vmatprep.subr.mxu0 %v165
    %901 = vmatpush1.msra.mxu0 %v164
    %902 = vmatprep.subr.mxu0 %v169
    %903 = vmatpush1.msra.mxu0 %v168
    %904 = vmatprep.subr.mxu0 %v173
    %905 = vmatpush1.msra.mxu0 %v172
    %906 = vmatprep.mubr.f32.mxu0 %v39
    %907 = vmatmul.mubr.f32.gmra.mrb[0].mxu0 %v38
    %v908 = vpop.f32.mrb[0].mxu0
    %v909 = vadd.f32 0.0, %v908
    %v910 = vpop.f32.mrb[0].mxu0
    %v911 = vadd.f32 0.0, %v910
    %912 = vdwg.mxu0
    %913 = vmatprep.subr.mxu0 %v177
    %914 = vmatpush1.msra.mxu0 %v176
    %915 = vmatprep.subr.mxu0 %v181
    %916 = vmatpush1.msra.mxu0 %v180
    %917 = vmatprep.subr.mxu0 %v185
    %918 = vmatpush1.msra.mxu0 %v184
    %919 = vmatprep.subr.mxu0 %v189
    %920 = vmatpush1.msra.mxu0 %v188
    %921 = vmatprep.subr.mxu0 %v193
    %922 = vmatpush1.msra.mxu0 %v192
    %923 = vmatprep.subr.mxu0 %v197
    %924 = vmatpush1.msra.mxu0 %v196
    %925 = vmatprep.subr.mxu0 %v201
    %926 = vmatpush1.msra.mxu0 %v200
    %927 = vmatprep.subr.mxu0 %v205
    %928 = vmatpush1.msra.mxu0 %v204
    %929 = vmatprep.subr.mxu0 %v209
    %930 = vmatpush1.msra.mxu0 %v208
    %931 = vmatprep.subr.mxu0 %v213
    %932 = vmatpush1.msra.mxu0 %v212
    %933 = vmatprep.subr.mxu0 %v217
    %934 = vmatpush1.msra.mxu0 %v216
    %935 = vmatprep.subr.mxu0 %v221
    %936 = vmatpush1.msra.mxu0 %v220
    %937 = vmatprep.subr.mxu0 %v225
    %938 = vmatpush1.msra.mxu0 %v224
    %939 = vmatprep.subr.mxu0 %v229
    %940 = vmatpush1.msra.mxu0 %v228
    %941 = vmatprep.subr.mxu0 %v233
    %942 = vmatpush1.msra.mxu0 %v232
    %943 = vmatprep.subr.mxu0 %v237
    %944 = vmatpush1.msra.mxu0 %v236
    %945 = vmatprep.subr.mxu0 %v241
    %946 = vmatpush1.msra.mxu0 %v240
    %947 = vmatprep.subr.mxu0 %v245
    %948 = vmatpush1.msra.mxu0 %v244
    %949 = vmatprep.subr.mxu0 %v249
    %950 = vmatpush1.msra.mxu0 %v248
    %951 = vmatprep.subr.mxu0 %v253
    %952 = vmatpush1.msra.mxu0 %v252
    %953 = vmatprep.subr.mxu0 %v257
    %954 = vmatpush1.msra.mxu0 %v256
    %955 = vmatprep.subr.mxu0 %v261
    %956 = vmatpush1.msra.mxu0 %v260
    %957 = vmatprep.subr.mxu0 %v265
    %958 = vmatpush1.msra.mxu0 %v264
    %959 = vmatprep.subr.mxu0 %v269
    %960 = vmatpush1.msra.mxu0 %v268
    %961 = vmatprep.subr.mxu0 %v273
    %962 = vmatpush1.msra.mxu0 %v272
    %963 = vmatprep.subr.mxu0 %v277
    %964 = vmatpush1.msra.mxu0 %v276
    %965 = vmatprep.subr.mxu0 %v281
    %966 = vmatpush1.msra.mxu0 %v280
    %967 = vmatprep.subr.mxu0 %v285
    %968 = vmatpush1.msra.mxu0 %v284
    %969 = vmatprep.subr.mxu0 %v289
    %970 = vmatpush1.msra.mxu0 %v288
    %971 = vmatprep.subr.mxu0 %v293
    %972 = vmatpush1.msra.mxu0 %v292
    %973 = vmatprep.subr.mxu0 %v297
    %974 = vmatpush1.msra.mxu0 %v296
    %975 = vmatprep.subr.mxu0 %v301
    %976 = vmatpush1.msra.mxu0 %v300
    %977 = vmatprep.mubr.f32.mxu0 %v41
    %978 = vmatmul.mubr.f32.gmra.mrb[0].mxu0 %v40
    %v979 = vpop.f32.mrb[0].mxu0
    %v980 = vadd.f32 %v909, %v979
    %v981 = vpop.f32.mrb[0].mxu0
    %v982 = vadd.f32 %v911, %v981
    %983 = vdwg.mxu0
    %984 = vmatprep.subr.mxu0 %v305
    %985 = vmatpush1.msra.mxu0 %v304
    %986 = vmatprep.subr.mxu0 %v309
    %987 = vmatpush1.msra.mxu0 %v308
    %988 = vmatprep.subr.mxu0 %v313
    %989 = vmatpush1.msra.mxu0 %v312
    %990 = vmatprep.subr.mxu0 %v317
    %991 = vmatpush1.msra.mxu0 %v316
    %992 = vmatprep.subr.mxu0 %v321
    %993 = vmatpush1.msra.mxu0 %v320
    %994 = vmatprep.subr.mxu0 %v325
    %995 = vmatpush1.msra.mxu0 %v324
    %996 = vmatprep.subr.mxu0 %v329
    %997 = vmatpush1.msra.mxu0 %v328
    %998 = vmatprep.subr.mxu0 %v333
    %999 = vmatpush1.msra.mxu0 %v332
    %1000 = vmatprep.subr.mxu0 %v337
    %1001 = vmatpush1.msra.mxu0 %v336
    %1002 = vmatprep.subr.mxu0 %v341
    %1003 = vmatpush1.msra.mxu0 %v340
    %1004 = vmatprep.subr.mxu0 %v345
    %1005 = vmatpush1.msra.mxu0 %v344
    %1006 = vmatprep.subr.mxu0 %v349
    %1007 = vmatpush1.msra.mxu0 %v348
    %1008 = vmatprep.subr.mxu0 %v353
    %1009 = vmatpush1.msra.mxu0 %v352
    %1010 = vmatprep.subr.mxu0 %v357
    %1011 = vmatpush1.msra.mxu0 %v356
    %1012 = vmatprep.subr.mxu0 %v361
    %1013 = vmatpush1.msra.mxu0 %v360
    %1014 = vmatprep.subr.mxu0 %v365
    %1015 = vmatpush1.msra.mxu0 %v364
    %1016 = vmatprep.subr.mxu0 %v369
    %1017 = vmatpush1.msra.mxu0 %v368
    %1018 = vmatprep.subr.mxu0 %v373
    %1019 = vmatpush1.msra.mxu0 %v372
    %1020 = vmatprep.subr.mxu0 %v377
    %1021 = vmatpush1.msra.mxu0 %v376
    %1022 = vmatprep.subr.mxu0 %v381
    %1023 = vmatpush1.msra.mxu0 %v380
    %1024 = vmatprep.subr.mxu0 %v385
    %1025 = vmatpush1.msra.mxu0 %v384
    %1026 = vmatprep.subr.mxu0 %v389
    %1027 = vmatpush1.msra.mxu0 %v388
    %1028 = vmatprep.subr.mxu0 %v393
    %1029 = vmatpush1.msra.mxu0 %v392
    %1030 = vmatprep.subr.mxu0 %v397
    %1031 = vmatpush1.msra.mxu0 %v396
    %1032 = vmatprep.subr.mxu0 %v401
    %1033 = vmatpush1.msra.mxu0 %v400
    %1034 = vmatprep.subr.mxu0 %v405
    %1035 = vmatpush1.msra.mxu0 %v404
    %1036 = vmatprep.subr.mxu0 %v409
    %1037 = vmatpush1.msra.mxu0 %v408
    %1038 = vmatprep.subr.mxu0 %v413
    %1039 = vmatpush1.msra.mxu0 %v412
    %1040 = vmatprep.subr.mxu0 %v417
    %1041 = vmatpush1.msra.mxu0 %v416
    %1042 = vmatprep.subr.mxu0 %v421
    %1043 = vmatpush1.msra.mxu0 %v420
    %1044 = vmatprep.subr.mxu0 %v425
    %1045 = vmatpush1.msra.mxu0 %v424
    %1046 = vmatprep.subr.mxu0 %v429
    %1047 = vmatpush1.msra.mxu0 %v428
    %1048 = vmatprep.mubr.f32.mxu0 %v43
    %1049 = vmatmul.mubr.f32.gmra.mrb[0].mxu0 %v42
    %v1050 = vpop.f32.mrb[0].mxu0
    %v1051 = vadd.f32 %v980, %v1050
    %v1052 = vpop.f32.mrb[0].mxu0
    %v1053 = vadd.f32 %v982, %v1052
    %1054 = vdwg.mxu0
    %1055 = vmatprep.subr.mxu0 %v433
    %1056 = vmatpush1.msra.mxu0 %v432
    %1057 = vmatprep.subr.mxu0 %v437
    %1058 = vmatpush1.msra.mxu0 %v436
    %1059 = vmatprep.subr.mxu0 %v441
    %1060 = vmatpush1.msra.mxu0 %v440
    %1061 = vmatprep.subr.mxu0 %v445
    %1062 = vmatpush1.msra.mxu0 %v444
    %1063 = vmatprep.subr.mxu0 %v449
    %1064 = vmatpush1.msra.mxu0 %v448
    %1065 = vmatprep.subr.mxu0 %v453
    %1066 = vmatpush1.msra.mxu0 %v452
    %1067 = vmatprep.subr.mxu0 %v457
    %1068 = vmatpush1.msra.mxu0 %v456
    %1069 = vmatprep.subr.mxu0 %v461
    %1070 = vmatpush1.msra.mxu0 %v460
    %1071 = vmatprep.subr.mxu0 %v465
    %1072 = vmatpush1.msra.mxu0 %v464
    %1073 = vmatprep.subr.mxu0 %v469
    %1074 = vmatpush1.msra.mxu0 %v468
    %1075 = vmatprep.subr.mxu0 %v473
    %1076 = vmatpush1.msra.mxu0 %v472
    %1077 = vmatprep.subr.mxu0 %v477
    %1078 = vmatpush1.msra.mxu0 %v476
    %1079 = vmatprep.subr.mxu0 %v481
    %1080 = vmatpush1.msra.mxu0 %v480
    %1081 = vmatprep.subr.mxu0 %v485
    %1082 = vmatpush1.msra.mxu0 %v484
    %1083 = vmatprep.subr.mxu0 %v489
    %1084 = vmatpush1.msra.mxu0 %v488
    %1085 = vmatprep.subr.mxu0 %v493
    %1086 = vmatpush1.msra.mxu0 %v492
    %1087 = vmatprep.subr.mxu0 %v497
    %1088 = vmatpush1.msra.mxu0 %v496
    %1089 = vmatprep.subr.mxu0 %v501
    %1090 = vmatpush1.msra.mxu0 %v500
    %1091 = vmatprep.subr.mxu0 %v505
    %1092 = vmatpush1.msra.mxu0 %v504
    %1093 = vmatprep.subr.mxu0 %v509
    %1094 = vmatpush1.msra.mxu0 %v508
    %1095 = vmatprep.subr.mxu0 %v513
    %1096 = vmatpush1.msra.mxu0 %v512
    %1097 = vmatprep.subr.mxu0 %v517
    %1098 = vmatpush1.msra.mxu0 %v516
    %1099 = vmatprep.subr.mxu0 %v521
    %1100 = vmatpush1.msra.mxu0 %v520
    %1101 = vmatprep.subr.mxu0 %v525
    %1102 = vmatpush1.msra.mxu0 %v524
    %1103 = vmatprep.subr.mxu0 %v529
    %1104 = vmatpush1.msra.mxu0 %v528
    %1105 = vmatprep.subr.mxu0 %v533
    %1106 = vmatpush1.msra.mxu0 %v532
    %1107 = vmatprep.subr.mxu0 %v537
    %1108 = vmatpush1.msra.mxu0 %v536
    %1109 = vmatprep.subr.mxu0 %v541
    %1110 = vmatpush1.msra.mxu0 %v540
    %1111 = vmatprep.subr.mxu0 %v545
    %1112 = vmatpush1.msra.mxu0 %v544
    %1113 = vmatprep.subr.mxu0 %v549
    %1114 = vmatpush1.msra.mxu0 %v548
    %1115 = vmatprep.subr.mxu0 %v553
    %1116 = vmatpush1.msra.mxu0 %v552
    %1117 = vmatprep.subr.mxu0 %v557
    %1118 = vmatpush1.msra.mxu0 %v556
    %1119 = vmatprep.mubr.f32.mxu0 %v45
    %1120 = vmatmul.mubr.f32.gmra.mrb[0].mxu0 %v44
    %v1121 = vpop.f32.mrb[0].mxu0
    %v1122 = vadd.f32 %v1051, %v1121
    %v1123 = vpop.f32.mrb[0].mxu0
    %v1124 = vadd.f32 %v1053, %v1123
    %1125 = vdwg.mxu0
    %vm1126 = vcmp.gt.f32.partialorder %v838, 0.0
    %vm1127 = vcmp.gt.f32.partialorder %v840, 0.0
    %vm1128 = vcmp.gt.f32.partialorder %v1122, 0.0
    %vm1129 = vcmp.gt.f32.partialorder %v1124, 0.0
    %v1130 = vsel %vm1126, 1.0, -1.0
    %v1131 = vsel %vm1127, 1.0, -1.0
    %v1132 = vsel %vm1128, 1.0, -1.0
    %v1133 = vsel %vm1129, 1.0, -1.0
    %1134 = vst [vmem:[#allocation7] sm:$0xff] %v1130
    %1135 = vst [vmem:[#allocation7 + $0x8] sm:$0xff] %v1131
    %1136 = vst [vmem:[#allocation7 + $0x10] sm:$0xff] %v1132
    %1137 = vst [vmem:[#allocation7 + $0x18] sm:$0xff] %v1133
    // Predicated region
    $region18: #{tpu_custom_call.1} parent=1 // pred_check
      _
    $region19: #{tpu_custom_call.1} parent=1 // pred_check_branch
      %1139 = sbr.rel (0) target = $region21
    $region20: #{tpu_custom_call.1} parent=1 // pred_region
      %s1141 = ssub.s32 512, 512
      %1142 = vsyncadd [#allocation4], %s1141
      %s1144 = sshll.u32 [#allocation7], 4
      %s1145 = int_to_ptr.vmem [resolvable:$true] %s1144
      %1147 = dma.vmem_to_hbm [thread:$0]  %s1145, 512, %s2, [#allocation4]
    $region21: #{tpu_custom_call.1} parent=1 // pred_fallthru
      _
    // Predicated region
    $region22: #{tpu_custom_call.1} parent=1 // pred_check
      _
    $region23: #{tpu_custom_call.1} parent=1 // pred_check_branch
      %1149 = sbr.rel (0) target = $region25
    $region24: #{tpu_custom_call.1} parent=1 // pred_region
      %1150 = dma.done [#allocation4], 512
    $region25: #{tpu_custom_call.1} parent=1 // pred_fallthru
      _
    %1151 = vsyncpa [#allocation3], 1
    %1152 = vsyncpa [#allocation6], 1
    %1153 = vsyncpa [#allocation4], 1

</llo_original>
